<compile_context>
chip_gen: v7x
topology: tpu7x:2x2x1
jax: 0.10.0
libtpu: 0.0.40
codegen_flags: <defaults>
</compile_context>

<pallas_src>
import jax
import jax.numpy as jnp
from jax import lax
from jax.experimental import pallas as pl
from jax.experimental.pallas import tpu as pltpu


# ----------------------------- helpers ------------------------------------- #

def _round_up(n, m):
    return ((n + m - 1) // m) * m


def _pick_tile_b(B):
    # Big tiles amortize the ~0.35 us/grid-step overhead (>=512 rows hits ~85%
    # of HBM roofline for streaming ops); cap at ceil(B/2) rounded to 128 so a
    # large batch still yields >= 2 grid steps for 2-TensorCore sharding (v7x).
    half = -(-B // 2)
    return max(128, min(2048, _round_up(half, 128)))


# ----------------------------- kernel -------------------------------------- #

def _fused_kernel(x_ref, w1_ref, b1_ref, w2_ref, b2_ref, wh_ref, bh_ref,
                  out_ref):
    # x_ref : (TILE_B, H) f32, streamed from HBM
    # w1    : (F, H)  bf16, b1: (F, 1)  f32
    # w2    : (F, F)  bf16, b2: (F, 1)  f32
    # wh    : (2T, F) bf16, bh: (2T, 1) f32   [output_layer ; logvar_layer]
    # out   : (2T, TILE_B) f32  (task-major -> lane-dense batch axis)
    x = x_ref[...].astype(jnp.bfloat16)                       # (TB, H)

    # Layer 1 -> feature-major: (F, TB) = w1 (F,H) contracted with x on H.
    h = lax.dot_general(
        w1_ref[...], x,
        dimension_numbers=(((1,), (1,)), ((), ())),
        preferred_element_type=jnp.float32) + b1_ref[...]
    h = jnp.maximum(h, 0.0)                                   # (F, TB) f32

    # Layer 2: (F, TB) = w2 (F,F) @ h (F,TB)
    h = jnp.dot(w2_ref[...], h.astype(jnp.bfloat16),
                preferred_element_type=jnp.float32) + b2_ref[...]
    h = jnp.maximum(h, 0.0)                                   # (F, TB) f32

    # Fused heads: (2T, TB) = wh (2T,F) @ h (F,TB)
    out_ref[...] = jnp.dot(wh_ref[...], h.astype(jnp.bfloat16),
                           preferred_element_type=jnp.float32) + bh_ref[...]


# ----------------------------- wrappers ------------------------------------ #

def header_fused(x, params):
    """Single pass over x.  Returns (B, 2T) f32 = [output logits | logvar]."""
    B, H = x.shape
    n_rows = params["bh"].shape[0]          # 2T (= 8 here: full-sublane f32 tile)
    F = params["w1"].shape[0]
    tile_b = _pick_tile_b(B)
    n_tiles = -(-B // tile_b)
    b_pad = n_tiles * tile_b

    wargs = (params["w1"], params["b1"], params["w2"], params["b2"],
             params["wh"], params["bh"])

    def full_spec(a):
        # Whole-array block, constant index_map -> stays VMEM-resident.
        return pl.BlockSpec(a.shape, lambda i, _nd=a.ndim: (0,) * _nd)

    cost = pl.CostEstimate(
        flops=2 * B * (H * F + F * F + F * n_rows),
        transcendentals=0,
        bytes_accessed=int(x.size) * x.dtype.itemsize
        + n_rows * b_pad * 4
        + sum(int(a.size) * a.dtype.itemsize for a in wargs),
    )

    out_t = pl.pallas_call(
        _fused_kernel,
        out_shape=jax.ShapeDtypeStruct((n_rows, b_pad), jnp.float32),
        grid_spec=pl.GridSpec(
            grid=(n_tiles,),
            in_specs=[pl.BlockSpec((tile_b, H), lambda i: (i, 0))]
                     + [full_spec(a) for a in wargs],
            out_specs=pl.BlockSpec((n_rows, tile_b), lambda i: (0, i)),
        ),
        compiler_params=pltpu.CompilerParams(
            dimension_semantics=("parallel",)),
        cost_estimate=cost,
    )(x, *wargs)

    # Back to batch-major; drop padded batch columns (garbage produced by the
    # ragged last input block -- never consumed downstream).
    return out_t[:, :B].T                                     # (B, 2T)


def header_regression(x, params):
    T = params["bh"].shape[0] // 2
    fused = header_fused(x, params)
    return fused[:, :T], fused[:, T:]                         # (output, logvar)


def header_classification(x, params, training=False):
    T = params["bh"].shape[0] // 2
    logits = header_fused(x, params)[:, :T]
    return logits if training else jax.nn.sigmoid(logits)


# ----------------------------- params -------------------------------------- #

def init_params(key, hidden_size, ffn_hidden_size, num_tasks):
    """PyTorch-style Linear init, repacked feature-major for the kernel:
    FFN/head weights kept in PyTorch (out, in) layout as bf16, biases as
    (out, 1) f32 columns (added to the f32 MXU accumulators)."""
    def linear(k, fan_in, fan_out):
        kw, kb = jax.random.split(k)
        bound = 1.0 / jnp.sqrt(fan_in)
        w = jax.random.uniform(kw, (fan_out, fan_in), jnp.float32, -bound, bound)
        b = jax.random.uniform(kb, (fan_out,), jnp.float32, -bound, bound)
        return w, b

    k1, k2, k3, k4 = jax.random.split(key, 4)
    w1, b1 = linear(k1, hidden_size, ffn_hidden_size)
    w2, b2 = linear(k2, ffn_hidden_size, ffn_hidden_size)
    wo, bo = linear(k3, ffn_hidden_size, num_tasks)
    wlv, blv = linear(k4, ffn_hidden_size, num_tasks)

    return dict(
        w1=w1.astype(jnp.bfloat16), b1=b1[:, None],                   # (F,H),(F,1)
        w2=w2.astype(jnp.bfloat16), b2=b2[:, None],                   # (F,F),(F,1)
        # fused heads: [output_layer ; logvar_layer], task-major
        wh=jnp.concatenate([wo, wlv], axis=0).astype(jnp.bfloat16),   # (2T, F)
        bh=jnp.concatenate([bo, blv], axis=0)[:, None],               # (2T, 1)
    )


# ----------------------------- main ----------------------------------------- #

if __name__ == "__main__":
    hidden_size = 32
    ffn_hidden_size = 32
    num_tasks = 4
    batch = 8

    key = jax.random.PRNGKey(0)
    kx, kp = jax.random.split(key)
    x = jax.random.normal(kx, (batch, hidden_size), jnp.float32)
    params = init_params(kp, hidden_size, ffn_hidden_size, num_tasks)

    # ONE kernel pass over x serves every branch of Header.forward:
    fused = header_fused(x, params)                    # (B, 2T)
    jax.block_until_ready(fused)
    output, logvar = fused[:, :num_tasks], fused[:, num_tasks:]   # regression
    logits_train = fused[:, :num_tasks]                # classification (train)
    probs = jax.nn.sigmoid(logits_train)               # classification (eval)

    # --- plain-JAX reference (same bf16 quantization points as the kernel) ---
    # NOTE: bf16 activations are part of this kernel's contract; expect ~1e-2
    # relative difference vs. a pure-f32 PyTorch Header.
    f32 = jnp.float32
    hp = jax.lax.Precision.HIGHEST
    xq = x.astype(jnp.bfloat16).astype(f32)
    w1f, w2f = params["w1"].astype(f32), params["w2"].astype(f32)
    whf = params["wh"].astype(f32)
    h = jnp.maximum(jnp.dot(xq, w1f.T, precision=hp) + params["b1"].T, 0.0)
    hq = h.astype(jnp.bfloat16).astype(f32)
    h = jnp.maximum(jnp.dot(hq, w2f.T, precision=hp) + params["b2"].T, 0.0)
    hq = h.astype(jnp.bfloat16).astype(f32)
    ref_2t = jnp.dot(hq, whf.T, precision=hp) + params["bh"].T
    ref_out, ref_lv = ref_2t[:, :num_tasks], ref_2t[:, num_tasks:]
    ref_pr = jax.nn.sigmoid(ref_out)

    assert jnp.allclose(output, ref_out, atol=1e-3, rtol=1e-3)
    assert jnp.allclose(logvar, ref_lv, atol=1e-3, rtol=1e-3)
    assert jnp.allclose(logits_train, ref_out, atol=1e-3, rtol=1e-3)
    assert jnp.allclose(probs, ref_pr, atol=1e-3, rtol=1e-3)

    # Branch wrappers (module-level API) share the same single-pass kernel.
    out2, lv2 = header_regression(x, params)
    pr2 = header_classification(x, params, training=False)
    jax.block_until_ready((out2, lv2, pr2))
    assert jnp.allclose(out2, ref_out, atol=1e-3, rtol=1e-3)
    assert jnp.allclose(lv2, ref_lv, atol=1e-3, rtol=1e-3)
    assert jnp.allclose(pr2, ref_pr, atol=1e-3, rtol=1e-3)

    print("KERNEL_OK")
</pallas_src>

<mosaic_0001>
module attributes {stable_mosaic.version = 11 : i64} {
  func.func @_fused_kernel(%arg0: i32, %arg1: memref<128x32xf32, #tpu.memory_space<vmem>>, %arg2: memref<32x32xbf16, #tpu.memory_space<vmem>>, %arg3: memref<32x1xf32, #tpu.memory_space<vmem>>, %arg4: memref<32x32xbf16, #tpu.memory_space<vmem>>, %arg5: memref<32x1xf32, #tpu.memory_space<vmem>>, %arg6: memref<8x32xbf16, #tpu.memory_space<vmem>>, %arg7: memref<8x1xf32, #tpu.memory_space<vmem>>, %arg8: memref<8x128xf32, #tpu.memory_space<vmem>>) attributes {dimension_semantics = [#tpu.dimension_semantics<parallel>], iteration_bounds = array<i64: 1>, scalar_prefetch = 0 : i64, scratch_operands = 0 : i64, tpu.core_type = #tpu.core_type<tc>, window_params = [{transform_indices = @transform_0, window_bounds = array<i64: 128, 32>}, {pipeline_mode = #tpu.pipeline_mode<synchronous>, transform_indices = @transform_1, window_bounds = array<i64: 32, 32>}, {pipeline_mode = #tpu.pipeline_mode<synchronous>, transform_indices = @transform_2, window_bounds = array<i64: 32, 1>}, {pipeline_mode = #tpu.pipeline_mode<synchronous>, transform_indices = @transform_3, window_bounds = array<i64: 32, 32>}, {pipeline_mode = #tpu.pipeline_mode<synchronous>, transform_indices = @transform_4, window_bounds = array<i64: 32, 1>}, {pipeline_mode = #tpu.pipeline_mode<synchronous>, transform_indices = @transform_5, window_bounds = array<i64: 8, 32>}, {pipeline_mode = #tpu.pipeline_mode<synchronous>, transform_indices = @transform_6, window_bounds = array<i64: 8, 1>}, {transform_indices = @transform_7, window_bounds = array<i64: 8, 128>}]} {
    %c0 = arith.constant 0 : index
    %c0_0 = arith.constant 0 : index
    %0 = vector.load %arg1[%c0, %c0_0] : memref<128x32xf32, #tpu.memory_space<vmem>>, vector<128x32xf32>
    %1 = arith.truncf %0 : vector<128x32xf32> to vector<128x32xbf16>
    %c0_1 = arith.constant 0 : index
    %c0_2 = arith.constant 0 : index
    %2 = vector.load %arg2[%c0_1, %c0_2] : memref<32x32xbf16, #tpu.memory_space<vmem>>, vector<32x32xbf16>
    %cst = arith.constant dense<0.000000e+00> : vector<32x128xf32>
    %3 = tpu.matmul %2, %1, %cst {dimension_numbers = #tpu.dot_dimension_numbers<[1], [1], [0], [0], [0, 0, 1, 0], [], []>} : vector<32x32xbf16>, vector<128x32xbf16>, vector<32x128xf32> -> vector<32x128xf32>
    %c0_3 = arith.constant 0 : index
    %c0_4 = arith.constant 0 : index
    %4 = vector.load %arg3[%c0_3, %c0_4] : memref<32x1xf32, #tpu.memory_space<vmem>>, vector<32x1xf32>
    %5 = vector.broadcast %4 : vector<32x1xf32> to vector<32x128xf32>
    %6 = arith.addf %3, %5 : vector<32x128xf32>
    %cst_5 = arith.constant 0.000000e+00 : f32
    %7 = vector.broadcast %cst_5 : f32 to vector<32x128xf32>
    %8 = arith.maximumf %6, %7 : vector<32x128xf32>
    %c0_6 = arith.constant 0 : index
    %c0_7 = arith.constant 0 : index
    %9 = vector.load %arg4[%c0_6, %c0_7] : memref<32x32xbf16, #tpu.memory_space<vmem>>, vector<32x32xbf16>
    %10 = arith.truncf %8 : vector<32x128xf32> to vector<32x128xbf16>
    %cst_8 = arith.constant dense<0.000000e+00> : vector<32x128xf32>
    %11 = tpu.matmul %9, %10, %cst_8 {dimension_numbers = #tpu.dot_dimension_numbers<[1], [0], [0], [1], [0, 0, 1, 1], [], []>} : vector<32x32xbf16>, vector<32x128xbf16>, vector<32x128xf32> -> vector<32x128xf32>
    %c0_9 = arith.constant 0 : index
    %c0_10 = arith.constant 0 : index
    %12 = vector.load %arg5[%c0_9, %c0_10] : memref<32x1xf32, #tpu.memory_space<vmem>>, vector<32x1xf32>
    %13 = vector.broadcast %12 : vector<32x1xf32> to vector<32x128xf32>
    %14 = arith.addf %11, %13 : vector<32x128xf32>
    %cst_11 = arith.constant 0.000000e+00 : f32
    %15 = vector.broadcast %cst_11 : f32 to vector<32x128xf32>
    %16 = arith.maximumf %14, %15 : vector<32x128xf32>
    %c0_12 = arith.constant 0 : index
    %c0_13 = arith.constant 0 : index
    %17 = vector.load %arg6[%c0_12, %c0_13] : memref<8x32xbf16, #tpu.memory_space<vmem>>, vector<8x32xbf16>
    %18 = arith.truncf %16 : vector<32x128xf32> to vector<32x128xbf16>
    %cst_14 = arith.constant dense<0.000000e+00> : vector<8x128xf32>
    %19 = tpu.matmul %17, %18, %cst_14 {dimension_numbers = #tpu.dot_dimension_numbers<[1], [0], [0], [1], [0, 0, 1, 1], [], []>} : vector<8x32xbf16>, vector<32x128xbf16>, vector<8x128xf32> -> vector<8x128xf32>
    %c0_15 = arith.constant 0 : index
    %c0_16 = arith.constant 0 : index
    %20 = vector.load %arg7[%c0_15, %c0_16] : memref<8x1xf32, #tpu.memory_space<vmem>>, vector<8x1xf32>
    %21 = vector.broadcast %20 : vector<8x1xf32> to vector<8x128xf32>
    %22 = arith.addf %19, %21 : vector<8x128xf32>
    %c0_17 = arith.constant 0 : index
    %c0_18 = arith.constant 0 : index
    %23 = vector.load %arg8[%c0_17, %c0_18] : memref<8x128xf32, #tpu.memory_space<vmem>>, vector<8x128xf32>
    tpu.vector_store %arg8[%c0_17, %c0_18], %22 {strides = array<i32>} : memref<8x128xf32, #tpu.memory_space<vmem>>, vector<8x128xf32>,
    return
  }
  func.func @transform_0(%arg0: i32) -> (i32, i32) {
    %c0_i32 = arith.constant 0 : i32
    %c0_i32_0 = arith.constant 0 : i32
    return %arg0, %c0_i32 : i32, i32
  }
  func.func @transform_1(%arg0: i32) -> (i32, i32) {
    %c0_i32 = arith.constant 0 : i32
    %c0_i32_0 = arith.constant 0 : i32
    %c0_i32_1 = arith.constant 0 : i32
    return %c0_i32, %c0_i32_0 : i32, i32
  }
  func.func @transform_2(%arg0: i32) -> (i32, i32) {
    %c0_i32 = arith.constant 0 : i32
    %c0_i32_0 = arith.constant 0 : i32
    %c0_i32_1 = arith.constant 0 : i32
    return %c0_i32, %c0_i32_0 : i32, i32
  }
  func.func @transform_3(%arg0: i32) -> (i32, i32) {
    %c0_i32 = arith.constant 0 : i32
    %c0_i32_0 = arith.constant 0 : i32
    %c0_i32_1 = arith.constant 0 : i32
    return %c0_i32, %c0_i32_0 : i32, i32
  }
  func.func @transform_4(%arg0: i32) -> (i32, i32) {
    %c0_i32 = arith.constant 0 : i32
    %c0_i32_0 = arith.constant 0 : i32
    %c0_i32_1 = arith.constant 0 : i32
    return %c0_i32, %c0_i32_0 : i32, i32
  }
  func.func @transform_5(%arg0: i32) -> (i32, i32) {
    %c0_i32 = arith.constant 0 : i32
    %c0_i32_0 = arith.constant 0 : i32
    %c0_i32_1 = arith.constant 0 : i32
    return %c0_i32, %c0_i32_0 : i32, i32
  }
  func.func @transform_6(%arg0: i32) -> (i32, i32) {
    %c0_i32 = arith.constant 0 : i32
    %c0_i32_0 = arith.constant 0 : i32
    %c0_i32_1 = arith.constant 0 : i32
    return %c0_i32, %c0_i32_0 : i32, i32
  }
  func.func @transform_7(%arg0: i32) -> (i32, i32) {
    %c0_i32 = arith.constant 0 : i32
    %c0_i32_0 = arith.constant 0 : i32
    return %c0_i32, %arg0 : i32, i32
  }
}

</mosaic_0001>

<llo_original>
// kernel: tpu_custom_call.1
$region0: #{tpu_custom_call.1}
  #allocation0 [shape = 'u32[]', space=smem, size = 0x4, offset = 0x4, fixed_abs, tag = 'smem constant byte address 0x4 - core index']
  #allocation1 [shape = 'u32[144,128]{1,0:T(1,128)}', space=vmem, size = 0x12000, scoped, tag = 'internal scratch']
  %s0 = inlined_call_operand.vmem [shape: f32[8,32], index: 0, kind: input, shape index: {}]
  %s1 = inlined_call_operand.vmem [shape: bf16[32,32], index: 1, kind: input, shape index: {}]
  %s2 = inlined_call_operand.vmem [shape: f32[32,1], index: 2, kind: input, shape index: {}]
  %s3 = inlined_call_operand.vmem [shape: bf16[32,32], index: 3, kind: input, shape index: {}]
  %s4 = inlined_call_operand.vmem [shape: f32[32,1], index: 4, kind: input, shape index: {}]
  %s5 = inlined_call_operand.vmem [shape: bf16[8,32], index: 5, kind: input, shape index: {}]
  %s6 = inlined_call_operand.vmem [shape: f32[8,1], index: 6, kind: input, shape index: {}]
  %s7 = inlined_call_operand.hbm [shape: f32[8,128], index: 7, kind: output, shape index: {}]
  %s8 = sld [smem:[#allocation0]]
  $region38: #{tpu_custom_call.1} parent=0
    _
  %s10 = ssub.s32 1, %s8
  %s11 = scalar_select 0, %s10, %s8
  $region1: #{tpu_custom_call.1} parent=0
    #allocation2 [shape = 'u8[4096]{0}', space=vmem, size = 0x1000, scoped, tag = 'output window, operand 0, single buffered']
    #allocation3 [shape = 's32[1]{0}', space=sflag, size = 0x4, scoped, tag = 'scoped memory for tpu_custom_call.1']
    %12 = vsyncpa [#allocation3], 0
    // Predicated region
    $region2: #{tpu_custom_call.1} parent=1 // pred_check
      _
    $region3: #{tpu_custom_call.1} parent=1 // pred_check_branch
      %14 = sbr.rel (0) target = $region5
    $region4: #{tpu_custom_call.1} parent=1 // pred_region
      _
    $region5: #{tpu_custom_call.1} parent=1 // pred_fallthru
      _
    // Predicated region
    $region6: #{tpu_custom_call.1} parent=1 // pred_check
      _
    $region7: #{tpu_custom_call.1} parent=1 // pred_check_branch
      %16 = sbr.rel (0) target = $region9
    $region8: #{tpu_custom_call.1} parent=1 // pred_region
      _
    $region9: #{tpu_custom_call.1} parent=1 // pred_fallthru
      _
    // Predicated region
    $region10: #{tpu_custom_call.1} parent=1 // pred_check
      _
    $region11: #{tpu_custom_call.1} parent=1 // pred_check_branch
      %18 = sbr.rel (0) target = $region13
    $region12: #{tpu_custom_call.1} parent=1 // pred_region
      _
    $region13: #{tpu_custom_call.1} parent=1 // pred_fallthru
      _
    // Predicated region
    $region14: #{tpu_custom_call.1} parent=1 // pred_check
      _
    $region15: #{tpu_custom_call.1} parent=1 // pred_check_branch
      %20 = sbr.rel (0) target = $region17
    $region16: #{tpu_custom_call.1} parent=1 // pred_region
      _
    $region17: #{tpu_custom_call.1} parent=1 // pred_fallthru
      _
    // Predicated region
    $region18: #{tpu_custom_call.1} parent=1 // pred_check
      _
    $region19: #{tpu_custom_call.1} parent=1 // pred_check_branch
      %22 = sbr.rel (0) target = $region21
    $region20: #{tpu_custom_call.1} parent=1 // pred_region
      _
    $region21: #{tpu_custom_call.1} parent=1 // pred_fallthru
      _
    // Predicated region
    $region22: #{tpu_custom_call.1} parent=1 // pred_check
      _
    $region23: #{tpu_custom_call.1} parent=1 // pred_check_branch
      %24 = sbr.rel (0) target = $region25
    $region24: #{tpu_custom_call.1} parent=1 // pred_region
      _
    $region25: #{tpu_custom_call.1} parent=1 // pred_fallthru
      _
    // Predicated region
    $region26: #{tpu_custom_call.1} parent=1 // pred_check
      _
    $region27: #{tpu_custom_call.1} parent=1 // pred_check_branch
      %26 = sbr.rel (0) target = $region29
    $region28: #{tpu_custom_call.1} parent=1 // pred_region
      _
    $region29: #{tpu_custom_call.1} parent=1 // pred_fallthru
      _
    %v28 = vld [vmem:[%s0] sm:$0xff]
    %v29 = vld [vmem:[%s0 + $0x8] sm:$0xff]
    %v30 = vld [vmem:[%s0 + $0x10] sm:$0xff]
    %v31 = vld [vmem:[%s0 + $0x18] sm:$0xff]
    %v32 = vld [vmem:[%s0 + $0x20] sm:$0xff]
    %v33 = vld [vmem:[%s0 + $0x28] sm:$0xff]
    %v34 = vld [vmem:[%s0 + $0x30] sm:$0xff]
    %v35 = vld [vmem:[%s0 + $0x38] sm:$0xff]
    %v36 = vld [vmem:[%s0 + $0x40] sm:$0xff]
    %v37 = vld [vmem:[%s0 + $0x48] sm:$0xff]
    %v38 = vld [vmem:[%s0 + $0x50] sm:$0xff]
    %v39 = vld [vmem:[%s0 + $0x58] sm:$0xff]
    %v40 = vld [vmem:[%s0 + $0x60] sm:$0xff]
    %v41 = vld [vmem:[%s0 + $0x68] sm:$0xff]
    %v42 = vld [vmem:[%s0 + $0x70] sm:$0xff]
    %v43 = vld [vmem:[%s0 + $0x78] sm:$0xff]
    %v44 = vpack.c.bf16 %v29, %v28
    %v45 = vpack.c.bf16 %v31, %v30
    %v46 = vpack.c.bf16 %v33, %v32
    %v47 = vpack.c.bf16 %v35, %v34
    %v48 = vpack.c.bf16 %v37, %v36
    %v49 = vpack.c.bf16 %v39, %v38
    %v50 = vpack.c.bf16 %v41, %v40
    %v51 = vpack.c.bf16 %v43, %v42
    %v52 = vld [vmem:[%s1] sm:$0xf]
    %v53 = vld [vmem:[%s1 + $0x4] sm:$0xf]
    %v54 = vld [vmem:[%s1 + $0x8] sm:$0xf]
    %v55 = vld [vmem:[%s1 + $0xc] sm:$0xf]
    %v56 = vld [vmem:[%s2] sm:$0xff]
    %v57 = vld [vmem:[%s2 + $0x8] sm:$0xff]
    %v58 = vld [vmem:[%s2 + $0x10] sm:$0xff]
    %v59 = vld [vmem:[%s2 + $0x18] sm:$0xff]
    %61 = vset.pattern.permute.xlu0 0
    %62 = vperm.xlu0 %61, %v56
    %v63 = vpop.permute.xlu0 %62
    %66 = vset.pattern.permute.xlu0 0
    %67 = vperm.xlu0 %66, %v57
    %v68 = vpop.permute.xlu0 %67
    %71 = vset.pattern.permute.xlu0 0
    %72 = vperm.xlu0 %71, %v58
    %v73 = vpop.permute.xlu0 %72
    %76 = vset.pattern.permute.xlu0 0
    %77 = vperm.xlu0 %76, %v59
    %v78 = vpop.permute.xlu0 %77
    %v84 = vunpack.c.l.b16 %v52
    %v85 = vunpack.c.l.b16 %v53
    %v86 = vunpack.c.l.b16 %v54
    %v87 = vunpack.c.l.b16 %v55
    %v88 = vpack.c.b16 %v85, %v84
    %v89 = vpack.c.b16 %v87, %v86
    %vm90 = vcmask 261120
    %v92 = vsel %vm90, %v88, 0
    %v95 = vsel %vm90, %v89, 0
    %v98 = vsel %vm90, %v44, 0
    %v101 = vsel %vm90, %v45, 0
    %v104 = vsel %vm90, %v46, 0
    %v107 = vsel %vm90, %v47, 0
    %v110 = vsel %vm90, %v48, 0
    %v113 = vsel %vm90, %v49, 0
    %v116 = vsel %vm90, %v50, 0
    %v119 = vsel %vm90, %v51, 0
    %121 = vmatprep.subr.bf16.mxu0 0
    %122 = vmatpush1.bf16.xpose.msra.mxu0 %v98
    %123 = vmatprep.subr.bf16.mxu0 0
    %124 = vmatpush1.bf16.xpose.msra.mxu0 %v101
    %125 = vmatprep.subr.bf16.mxu0 0
    %126 = vmatpush1.bf16.xpose.msra.mxu0 %v104
    %127 = vmatprep.subr.bf16.mxu0 0
    %128 = vmatpush1.bf16.xpose.msra.mxu0 %v107
    %129 = vmatprep.subr.bf16.mxu0 0
    %130 = vmatpush1.bf16.xpose.msra.mxu0 %v110
    %131 = vmatprep.subr.bf16.mxu0 0
    %132 = vmatpush1.bf16.xpose.msra.mxu0 %v113
    %133 = vmatprep.subr.bf16.mxu0 0
    %134 = vmatpush1.bf16.xpose.msra.mxu0 %v116
    %135 = vmatprep.subr.bf16.mxu0 0
    %136 = vmatpush1.bf16.xpose.msra.mxu0 %v119
    %137 = vmatprep.subr.bf16.mxu0 0
    %138 = vmatpush1.bf16.xpose.msra.mxu0 0
    %139 = vmatprep.subr.bf16.mxu0 0
    %140 = vmatpush1.bf16.xpose.msra.mxu0 0
    %141 = vmatprep.subr.bf16.mxu0 0
    %142 = vmatpush1.bf16.xpose.msra.mxu0 0
    %143 = vmatprep.subr.bf16.mxu0 0
    %144 = vmatpush1.bf16.xpose.msra.mxu0 0
    %145 = vmatprep.subr.bf16.mxu0 0
    %146 = vmatpush1.bf16.xpose.msra.mxu0 0
    %147 = vmatprep.subr.bf16.mxu0 0
    %148 = vmatpush1.bf16.xpose.msra.mxu0 0
    %149 = vmatprep.subr.bf16.mxu0 0
    %150 = vmatpush1.bf16.xpose.msra.mxu0 0
    %151 = vmatprep.subr.bf16.mxu0 0
    %152 = vmatpush1.bf16.xpose.msra.mxu0 0
    %153 = vmatprep.mubr.bf16.mxu0 0
    %154 = vmatmul.mubr.bf16.gmra.mrb[0].mxu0 %v92
    %v155 = vpop.f32.mrb[0].mxu0
    %v156 = vadd.f32 %v63, %v155
    %v157 = vpop.f32.mrb[0].mxu0
    %v158 = vpop.f32.mrb[0].mxu0
    %v159 = vadd.f32 %v68, %v158
    %v160 = vpop.f32.mrb[0].mxu0
    %161 = vmatprep.mubr.bf16.mxu0 0
    %162 = vmatmul.mubr.bf16.gmra.mrb[0].mxu0 %v95
    %v163 = vpop.f32.mrb[0].mxu0
    %v164 = vadd.f32 %v73, %v163
    %v165 = vpop.f32.mrb[0].mxu0
    %v166 = vpop.f32.mrb[0].mxu0
    %v167 = vadd.f32 %v78, %v166
    %v168 = vpop.f32.mrb[0].mxu0
    %169 = vdwg.mxu0
    %v170 = vmax.f32 %v156, 0.0
    %v171 = vmax.f32 %v159, 0.0
    %v172 = vmax.f32 %v164, 0.0
    %v173 = vmax.f32 %v167, 0.0
    %v174 = vld [vmem:[%s3] sm:$0xf]
    %v175 = vld [vmem:[%s3 + $0x4] sm:$0xf]
    %v176 = vld [vmem:[%s3 + $0x8] sm:$0xf]
    %v177 = vld [vmem:[%s3 + $0xc] sm:$0xf]
    %v178 = vpack.c.bf16 %v171, %v170
    %v179 = vpack.c.bf16 %v173, %v172
    %v180 = vld [vmem:[%s4] sm:$0xff]
    %v181 = vld [vmem:[%s4 + $0x8] sm:$0xff]
    %v182 = vld [vmem:[%s4 + $0x10] sm:$0xff]
    %v183 = vld [vmem:[%s4 + $0x18] sm:$0xff]
    %185 = vset.pattern.permute.xlu0 0
    %186 = vperm.xlu0 %185, %v180
    %v187 = vpop.permute.xlu0 %186
    %190 = vset.pattern.permute.xlu0 0
    %191 = vperm.xlu0 %190, %v181
    %v192 = vpop.permute.xlu0 %191
    %195 = vset.pattern.permute.xlu0 0
    %196 = vperm.xlu0 %195, %v182
    %v197 = vpop.permute.xlu0 %196
    %200 = vset.pattern.permute.xlu0 0
    %201 = vperm.xlu0 %200, %v183
    %v202 = vpop.permute.xlu0 %201
    %v208 = vunpack.c.l.b16 %v174
    %v209 = vunpack.c.l.b16 %v175
    %v210 = vunpack.c.l.b16 %v176
    %v211 = vunpack.c.l.b16 %v177
    %v212 = vpack.c.b16 %v209, %v208
    %v213 = vpack.c.b16 %v211, %v210
    %v215 = vsel %vm90, %v212, 0
    %v218 = vsel %vm90, %v213, 0
    %220 = vmatprep.subr.bf16.mxu0 0
    %221 = vmatpush1.bf16.msra.mxu0 %v178
    %222 = vmatprep.subr.bf16.mxu0 0
    %223 = vmatpush1.bf16.msra.mxu0 %v179
    %224 = vmatprep.subr.bf16.mxu0 0
    %225 = vmatpush1.bf16.msra.mxu0 0
    %226 = vmatprep.subr.bf16.mxu0 0
    %227 = vmatpush1.bf16.msra.mxu0 0
    %228 = vmatprep.subr.bf16.mxu0 0
    %229 = vmatpush1.bf16.msra.mxu0 0
    %230 = vmatprep.subr.bf16.mxu0 0
    %231 = vmatpush1.bf16.msra.mxu0 0
    %232 = vmatprep.subr.bf16.mxu0 0
    %233 = vmatpush1.bf16.msra.mxu0 0
    %234 = vmatprep.subr.bf16.mxu0 0
    %235 = vmatpush1.bf16.msra.mxu0 0
    %236 = vmatprep.subr.bf16.mxu0 0
    %237 = vmatpush1.bf16.msra.mxu0 0
    %238 = vmatprep.subr.bf16.mxu0 0
    %239 = vmatpush1.bf16.msra.mxu0 0
    %240 = vmatprep.subr.bf16.mxu0 0
    %241 = vmatpush1.bf16.msra.mxu0 0
    %242 = vmatprep.subr.bf16.mxu0 0
    %243 = vmatpush1.bf16.msra.mxu0 0
    %244 = vmatprep.subr.bf16.mxu0 0
    %245 = vmatpush1.bf16.msra.mxu0 0
    %246 = vmatprep.subr.bf16.mxu0 0
    %247 = vmatpush1.bf16.msra.mxu0 0
    %248 = vmatprep.subr.bf16.mxu0 0
    %249 = vmatpush1.bf16.msra.mxu0 0
    %250 = vmatprep.subr.bf16.mxu0 0
    %251 = vmatpush1.bf16.msra.mxu0 0
    %252 = vmatprep.mubr.bf16.mxu0 0
    %253 = vmatmul.mubr.bf16.gmra.mrb[0].mxu0 %v215
    %v254 = vpop.f32.mrb[0].mxu0
    %v255 = vadd.f32 %v187, %v254
    %v256 = vpop.f32.mrb[0].mxu0
    %v257 = vpop.f32.mrb[0].mxu0
    %v258 = vadd.f32 %v192, %v257
    %v259 = vpop.f32.mrb[0].mxu0
    %260 = vmatprep.mubr.bf16.mxu0 0
    %261 = vmatmul.mubr.bf16.gmra.mrb[0].mxu0 %v218
    %v262 = vpop.f32.mrb[0].mxu0
    %v263 = vadd.f32 %v197, %v262
    %v264 = vpop.f32.mrb[0].mxu0
    %v265 = vpop.f32.mrb[0].mxu0
    %v266 = vadd.f32 %v202, %v265
    %v267 = vpop.f32.mrb[0].mxu0
    %268 = vdwg.mxu0
    %v269 = vmax.f32 %v255, 0.0
    %v270 = vmax.f32 %v258, 0.0
    %v271 = vmax.f32 %v263, 0.0
    %v272 = vmax.f32 %v266, 0.0
    %v273 = vld [vmem:[%s5] sm:$0xf]
    %v274 = vpack.c.bf16 %v270, %v269
    %v275 = vpack.c.bf16 %v272, %v271
    %v276 = vld [vmem:[%s6] sm:$0xff]
    %278 = vset.pattern.permute.xlu0 0
    %279 = vperm.xlu0 %278, %v276
    %v280 = vpop.permute.xlu0 %279
    %v283 = vsel %vm90, %v273, 0
    %285 = vmatprep.subr.bf16.mxu0 0
    %286 = vmatpush1.bf16.msra.mxu0 %v274
    %287 = vmatprep.subr.bf16.mxu0 0
    %288 = vmatpush1.bf16.msra.mxu0 %v275
    %289 = vmatprep.subr.bf16.mxu0 0
    %290 = vmatpush1.bf16.msra.mxu0 0
    %291 = vmatprep.subr.bf16.mxu0 0
    %292 = vmatpush1.bf16.msra.mxu0 0
    %293 = vmatprep.subr.bf16.mxu0 0
    %294 = vmatpush1.bf16.msra.mxu0 0
    %295 = vmatprep.subr.bf16.mxu0 0
    %296 = vmatpush1.bf16.msra.mxu0 0
    %297 = vmatprep.subr.bf16.mxu0 0
    %298 = vmatpush1.bf16.msra.mxu0 0
    %299 = vmatprep.subr.bf16.mxu0 0
    %300 = vmatpush1.bf16.msra.mxu0 0
    %301 = vmatprep.subr.bf16.mxu0 0
    %302 = vmatpush1.bf16.msra.mxu0 0
    %303 = vmatprep.subr.bf16.mxu0 0
    %304 = vmatpush1.bf16.msra.mxu0 0
    %305 = vmatprep.subr.bf16.mxu0 0
    %306 = vmatpush1.bf16.msra.mxu0 0
    %307 = vmatprep.subr.bf16.mxu0 0
    %308 = vmatpush1.bf16.msra.mxu0 0
    %309 = vmatprep.subr.bf16.mxu0 0
    %310 = vmatpush1.bf16.msra.mxu0 0
    %311 = vmatprep.subr.bf16.mxu0 0
    %312 = vmatpush1.bf16.msra.mxu0 0
    %313 = vmatprep.subr.bf16.mxu0 0
    %314 = vmatpush1.bf16.msra.mxu0 0
    %315 = vmatprep.subr.bf16.mxu0 0
    %316 = vmatpush1.bf16.msra.mxu0 0
    %317 = vmatprep.mubr.bf16.mxu0 0
    %318 = vmatmul.mubr.bf16.gmra.mrb[0].mxu0 %v283
    %v319 = vpop.f32.mrb[0].mxu0
    %v320 = vadd.f32 %v280, %v319
    %v321 = vpop.f32.mrb[0].mxu0
    %v322 = vpop.f32.mrb[0].mxu0
    %v323 = vpop.f32.mrb[0].mxu0
    %324 = vdwg.mxu0
    %325 = vst [vmem:[#allocation2] sm:$0xff] %v320
    // Predicated region
    $region30: #{tpu_custom_call.1} parent=1 // pred_check
      _
    $region31: #{tpu_custom_call.1} parent=1 // pred_check_branch
      %327 = sbr.rel (0) target = $region33
    $region32: #{tpu_custom_call.1} parent=1 // pred_region
      %s329 = ssub.s32 128, 128
      %330 = vsyncadd [#allocation3], %s329
      %s332 = sshll.u32 [#allocation2], 4
      %s333 = int_to_ptr.vmem [resolvable:$true] %s332
      %335 = dma.vmem_to_hbm [thread:$0]  %s333, 128, %s7, [#allocation3]
    $region33: #{tpu_custom_call.1} parent=1 // pred_fallthru
      _
    // Predicated region
    $region34: #{tpu_custom_call.1} parent=1 // pred_check
      _
    $region35: #{tpu_custom_call.1} parent=1 // pred_check_branch
      %337 = sbr.rel (0) target = $region37
    $region36: #{tpu_custom_call.1} parent=1 // pred_region
      %338 = dma.done [#allocation3], 128
    $region37: #{tpu_custom_call.1} parent=1 // pred_fallthru
      _
    %339 = vsyncpa [#allocation3], 1

</llo_original>
